<compile_context>
chip_gen: v7x
topology: tpu7x:2x2x1
jax: 0.10.0
libtpu: 0.0.40
codegen_flags: <defaults>
</compile_context>

<pallas_src>
import functools

import jax
import jax.numpy as jnp
from jax import lax
from jax.experimental import pallas as pl
from jax.experimental.pallas import tpu as pltpu

C_OUT = 10          # conv output channels
OH = OW = 14        # conv output spatial dims (28 with stride 2, pad 1)
HW = OH * OW        # 196
N_TAPS = 9          # 3x3 kernel
N_CLASSES = 10
LANES = 128         # lane-padded output width


# ---------------------------------------------------------------------------
# Fused Pallas kernel: conv(9 shifted MACs) + bias + ReLU + fc + log_softmax
# ---------------------------------------------------------------------------
def fused_cnn_kernel(p_ref, cw_ref, cb_ref, fcw_ref, fcb_ref, o_ref, *, sub_n):
    # p_ref  : (9, TB, 196)   f32 VMEM   conv taps, lane-dense (196 lanes)
    # cw_ref : (10, 9)        f32 SMEM   conv weights (scalars)
    # cb_ref : (10,)          f32 SMEM   conv bias    (scalars)
    # fcw_ref: (10, 196, 128) f32 VMEM   fc weight, flatten order folded, zero-padded lanes
    # fcb_ref: (1, 128)       f32 VMEM   fc bias, zero-padded lanes
    # o_ref  : (TB, 128)      f32 VMEM   log-probs in lanes [0, 10), zeros elsewhere
    tb = o_ref.shape[0]
    n_sub = tb // sub_n

    lane = lax.broadcasted_iota(jnp.int32, (sub_n, LANES), 1)
    valid = lane < N_CLASSES                      # hoisted out of the loops

    @pl.loop(0, n_sub)                            # strip-mine the batch tile in VMEM
    def _(s):
        off = pl.multiple_of(s * sub_n, 8)

        def chan_body(c, logits):
            # conv channel c: 9 scalar-broadcast multiply-accumulates on the VPU
            acc = p_ref[0, pl.ds(off, sub_n), :] * cw_ref[c, 0]
            for t in range(1, N_TAPS):
                acc = acc + p_ref[t, pl.ds(off, sub_n), :] * cw_ref[c, t]
            act = jnp.maximum(acc + cb_ref[c], 0.0)          # (sub_n, 196) ReLU, f32
            # fc contribution of channel c on the MXU (N padded to 128: same MXU cost)
            return logits + jnp.dot(act, fcw_ref[c],
                                    preferred_element_type=jnp.float32)

        logits0 = fcb_ref[...] + jnp.zeros((sub_n, LANES), jnp.float32)
        logits = lax.fori_loop(0, C_OUT, chan_body, logits0)  # bounded live ranges

        # log_softmax over the 10 real classes (padded lanes masked out)
        masked = jnp.where(valid, logits, -jnp.inf)
        m = jnp.max(masked, axis=-1, keepdims=True)
        e = jnp.exp(masked - m)                   # padded lanes -> exp(-inf) = 0
        lse = jnp.log(jnp.sum(e, axis=-1, keepdims=True))
        o_ref[pl.ds(off, sub_n), :] = jnp.where(valid, logits - m - lse, 0.0)


# ---------------------------------------------------------------------------
# Wrapper
# ---------------------------------------------------------------------------
def _round_up(a, m):
    return ((a + m - 1) // m) * m


def _build_taps(x):
    """x: (N, 1, 28, 28) -> taps (9, N, 196) for k=3, stride=2, pad=1 (lane-dense)."""
    n = x.shape[0]
    x2 = x.astype(jnp.float32).reshape(n, 28, 28)
    x_pad = jnp.pad(x2, ((0, 0), (1, 1), (1, 1)))             # (N, 30, 30)
    taps = [x_pad[:, di:di + 28:2, dj:dj + 28:2]               # each (N, 14, 14)
            for di in range(3) for dj in range(3)]
    return jnp.stack(taps, axis=0).reshape(N_TAPS, n, HW)      # (9, N, 196)


@jax.jit
def simple_cnn_forward(x, conv_w, conv_b, fc_w, fc_b):
    """x: (N, 1, 28, 28) NCHW.  Returns log-probs (N, 10)."""
    n = x.shape[0]
    patches = _build_taps(x)                                   # (9, N, 196)

    # Batch tiling: >=2 grid steps whenever possible (v7x 2 TensorCores), <=512
    # rows per step, strip-mined in-kernel over <=64-row sub-blocks.
    n8 = _round_up(n, 8)
    g = max(2 if n8 > 8 else 1, -(-n8 // 512))                 # number of grid steps
    rows = -(-n8 // g)
    sub = min(64, _round_up(rows, 8))                          # in-kernel sub-block
    tb = _round_up(rows, sub)                                  # rows per grid step
    n_pad = _round_up(n8, tb)
    if n_pad != n:
        patches = jnp.pad(patches, ((0, 0), (0, n_pad - n), (0, 0)))

    # Parameters (one-time trace-level reshapes).
    cw = conv_w.reshape(C_OUT, N_TAPS).astype(jnp.float32)     # (10, 9)  -> SMEM
    cb = conv_b.astype(jnp.float32)                            # (10,)    -> SMEM
    # Fold PyTorch channel-major flatten (idx = c*196 + hw) into the fc weight and
    # zero-pad the class dim to 128 lanes (lane-dense output, same MXU/VPU cost).
    fcw_r = jnp.transpose(
        fc_w.astype(jnp.float32).reshape(N_CLASSES, C_OUT, HW), (1, 2, 0))   # (10,196,10)
    fcw_p = jnp.pad(fcw_r, ((0, 0), (0, 0), (0, LANES - N_CLASSES)))         # (10,196,128)
    fcb_p = jnp.pad(fc_b.astype(jnp.float32),
                    (0, LANES - N_CLASSES)).reshape(1, LANES)                # (1,128)

    grid = (n_pad // tb,)
    flops = n_pad * (2 * HW * N_TAPS * C_OUT + 2 * HW * LANES * C_OUT)
    bytes_accessed = int(4 * (patches.size + cw.size + cb.size
                              + fcw_p.size + fcb_p.size + n_pad * LANES))

    out = pl.pallas_call(
        functools.partial(fused_cnn_kernel, sub_n=sub),
        out_shape=jax.ShapeDtypeStruct((n_pad, LANES), jnp.float32),
        grid=grid,
        in_specs=[
            # taps: tile over batch, taps/lanes full
            pl.BlockSpec((N_TAPS, tb, HW), lambda i: (0, i, 0)),
            # small scalar tables live in SMEM, resident across all tiles
            pl.BlockSpec(memory_space=pltpu.MemorySpace.SMEM),
            pl.BlockSpec(memory_space=pltpu.MemorySpace.SMEM),
            # fc weights stay VMEM-resident (constant index_map)
            pl.BlockSpec((C_OUT, HW, LANES), lambda i: (0, 0, 0)),
            pl.BlockSpec((1, LANES), lambda i: (0, 0)),
        ],
        out_specs=pl.BlockSpec((tb, LANES), lambda i: (i, 0)),
        compiler_params=pltpu.CompilerParams(
            dimension_semantics=("parallel",),
            # allow XLA to fuse the tap-extraction producer into the kernel input
            # (review item 1, option (a)) instead of materializing it in HBM.
            allow_input_fusion=[True, False, False, False, False]),
        cost_estimate=pl.CostEstimate(
            flops=flops,
            transcendentals=n_pad * (LANES + 1),
            bytes_accessed=bytes_accessed),
    )(patches, cw, cb, fcw_p, fcb_p)

    return out[:n, :N_CLASSES]


# ---------------------------------------------------------------------------
# Pure-JAX reference for sanity check
# ---------------------------------------------------------------------------
def _reference(x, conv_w, conv_b, fc_w, fc_b):
    y = lax.conv_general_dilated(
        x, conv_w, window_strides=(2, 2), padding=((1, 1), (1, 1)),
        dimension_numbers=("NCHW", "OIHW", "NCHW"),
        precision=lax.Precision.HIGHEST)
    y = y + conv_b.reshape(1, -1, 1, 1)
    y = jnp.maximum(y, 0.0)
    y = y.reshape(x.shape[0], -1)
    logits = jnp.dot(y, fc_w.T, precision=lax.Precision.HIGHEST) + fc_b
    return jax.nn.log_softmax(logits, axis=-1)


if __name__ == "__main__":
    key = jax.random.PRNGKey(0)
    k_x, k_cw, k_cb, k_fw, k_fb = jax.random.split(key, 5)

    batch = 2
    # Input spatial size is fixed by the fc layer: 28*28*10 // 4 = 1960 features.
    x = jax.random.normal(k_x, (batch, 1, 28, 28), dtype=jnp.float32)

    conv_bound = 1.0 / (1 * 3 * 3) ** 0.5
    conv_w = jax.random.uniform(k_cw, (10, 1, 3, 3), jnp.float32,
                                -conv_bound, conv_bound)
    conv_b = jax.random.uniform(k_cb, (10,), jnp.float32,
                                -conv_bound, conv_bound)
    fc_bound = 1.0 / (1960.0 ** 0.5)
    fc_w = jax.random.uniform(k_fw, (10, 1960), jnp.float32, -fc_bound, fc_bound)
    fc_b = jax.random.uniform(k_fb, (10,), jnp.float32, -fc_bound, fc_bound)

    out = simple_cnn_forward(x, conv_w, conv_b, fc_w, fc_b)
    out = jax.block_until_ready(out)

    ref = _reference(x, conv_w, conv_b, fc_w, fc_b)
    assert out.shape == (batch, 10)
    assert jnp.allclose(out, ref, atol=2e-4, rtol=2e-4), "mismatch vs reference"

    print("KERNEL_OK")
</pallas_src>

<mosaic_0001>
module attributes {stable_mosaic.version = 11 : i64} {
  func.func @fused_cnn_kernel(%arg0: i32, %arg1: memref<9x8x196xf32, #tpu.memory_space<vmem>>, %arg2: memref<10x9xf32, #tpu.memory_space<smem>>, %arg3: memref<10xf32, #tpu.memory_space<smem>>, %arg4: memref<10x196x128xf32, #tpu.memory_space<vmem>>, %arg5: memref<1x128xf32, #tpu.memory_space<vmem>>, %arg6: memref<8x128xf32, #tpu.memory_space<vmem>>) attributes {dimension_semantics = [#tpu.dimension_semantics<parallel>], iteration_bounds = array<i64: 1>, scalar_prefetch = 0 : i64, scratch_operands = 0 : i64, tpu.core_type = #tpu.core_type<tc>, window_params = [{transform_indices = @transform_0, window_bounds = array<i64: 9, 8, 196>}, {transform_indices = @transform_1, window_bounds = array<i64: 10, 9>}, {transform_indices = @transform_2, window_bounds = array<i64: 10>}, {pipeline_mode = #tpu.pipeline_mode<synchronous>, transform_indices = @transform_3, window_bounds = array<i64: 10, 196, 128>}, {pipeline_mode = #tpu.pipeline_mode<synchronous>, transform_indices = @transform_4, window_bounds = array<i64: 1, 128>}, {transform_indices = @transform_5, window_bounds = array<i64: 8, 128>}]} {
    %0 = tpu.iota {dimensions = array<i32: 1>} : vector<8x128xi32>
    %c10_i32 = arith.constant 10 : i32
    %1 = vector.broadcast %c10_i32 : i32 to vector<8x128xi32>
    %2 = arith.cmpi slt, %0, %1 : vector<8x128xi32>
    %c0_i32 = arith.constant 0 : i32
    %c1_i32 = arith.constant 1 : i32
    %3 = arith.muli %c0_i32, %c1_i32 : i32
    %c0_i32_0 = arith.constant 0 : i32
    %4 = arith.addi %c0_i32_0, %3 : i32
    %c8_i32 = arith.constant 8 : i32
    %5 = arith.muli %4, %c8_i32 : i32
    %6 = tpu.assume_multiple %5, 8 : i32
    %c0 = arith.constant 0 : index
    %c0_1 = arith.constant 0 : index
    %7 = vector.load %arg5[%c0, %c0_1] : memref<1x128xf32, #tpu.memory_space<vmem>>, vector<1x128xf32>
    %cst = arith.constant 0.000000e+00 : f32
    %8 = vector.broadcast %cst : f32 to vector<8x128xf32>
    %9 = vector.broadcast %7 : vector<1x128xf32> to vector<8x128xf32>
    %10 = arith.addf %9, %8 : vector<8x128xf32>
    %c0_i32_2 = arith.constant 0 : i32
    %c10_i32_3 = arith.constant 10 : i32
    %11 = arith.addi %c0_i32_2, %c10_i32_3 : i32
    %c1_i32_4 = arith.constant 1 : i32
    %12 = scf.for %arg7 = %c0_i32_2 to %11 step %c1_i32_4 iter_args(%arg8 = %10) -> (vector<8x128xf32>)  : i32 {
      %c0_12 = arith.constant 0 : index
      %31 = arith.index_cast %6 : i32 to index
      %c0_13 = arith.constant 0 : index
      %32 = vector.load %arg1[%c0_12, %31, %c0_13] : memref<9x8x196xf32, #tpu.memory_space<vmem>>, vector<1x8x196xf32>
      %33 = vector.shape_cast %32 : vector<1x8x196xf32> to vector<8x196xf32>
      %34 = arith.index_cast %arg7 : i32 to index
      %c0_14 = arith.constant 0 : index
      %35 = memref.load %arg2[%34, %c0_14] : memref<10x9xf32, #tpu.memory_space<smem>>
      %36 = vector.broadcast %35 : f32 to vector<8x196xf32>
      %37 = arith.mulf %33, %36 : vector<8x196xf32>
      %c1 = arith.constant 1 : index
      %38 = arith.index_cast %6 : i32 to index
      %c0_15 = arith.constant 0 : index
      %39 = vector.load %arg1[%c1, %38, %c0_15] : memref<9x8x196xf32, #tpu.memory_space<vmem>>, vector<1x8x196xf32>
      %40 = vector.shape_cast %39 : vector<1x8x196xf32> to vector<8x196xf32>
      %41 = arith.index_cast %arg7 : i32 to index
      %c1_16 = arith.constant 1 : index
      %42 = memref.load %arg2[%41, %c1_16] : memref<10x9xf32, #tpu.memory_space<smem>>
      %43 = vector.broadcast %42 : f32 to vector<8x196xf32>
      %44 = arith.mulf %40, %43 : vector<8x196xf32>
      %45 = arith.addf %37, %44 : vector<8x196xf32>
      %c2 = arith.constant 2 : index
      %46 = arith.index_cast %6 : i32 to index
      %c0_17 = arith.constant 0 : index
      %47 = vector.load %arg1[%c2, %46, %c0_17] : memref<9x8x196xf32, #tpu.memory_space<vmem>>, vector<1x8x196xf32>
      %48 = vector.shape_cast %47 : vector<1x8x196xf32> to vector<8x196xf32>
      %49 = arith.index_cast %arg7 : i32 to index
      %c2_18 = arith.constant 2 : index
      %50 = memref.load %arg2[%49, %c2_18] : memref<10x9xf32, #tpu.memory_space<smem>>
      %51 = vector.broadcast %50 : f32 to vector<8x196xf32>
      %52 = arith.mulf %48, %51 : vector<8x196xf32>
      %53 = arith.addf %45, %52 : vector<8x196xf32>
      %c3 = arith.constant 3 : index
      %54 = arith.index_cast %6 : i32 to index
      %c0_19 = arith.constant 0 : index
      %55 = vector.load %arg1[%c3, %54, %c0_19] : memref<9x8x196xf32, #tpu.memory_space<vmem>>, vector<1x8x196xf32>
      %56 = vector.shape_cast %55 : vector<1x8x196xf32> to vector<8x196xf32>
      %57 = arith.index_cast %arg7 : i32 to index
      %c3_20 = arith.constant 3 : index
      %58 = memref.load %arg2[%57, %c3_20] : memref<10x9xf32, #tpu.memory_space<smem>>
      %59 = vector.broadcast %58 : f32 to vector<8x196xf32>
      %60 = arith.mulf %56, %59 : vector<8x196xf32>
      %61 = arith.addf %53, %60 : vector<8x196xf32>
      %c4 = arith.constant 4 : index
      %62 = arith.index_cast %6 : i32 to index
      %c0_21 = arith.constant 0 : index
      %63 = vector.load %arg1[%c4, %62, %c0_21] : memref<9x8x196xf32, #tpu.memory_space<vmem>>, vector<1x8x196xf32>
      %64 = vector.shape_cast %63 : vector<1x8x196xf32> to vector<8x196xf32>
      %65 = arith.index_cast %arg7 : i32 to index
      %c4_22 = arith.constant 4 : index
      %66 = memref.load %arg2[%65, %c4_22] : memref<10x9xf32, #tpu.memory_space<smem>>
      %67 = vector.broadcast %66 : f32 to vector<8x196xf32>
      %68 = arith.mulf %64, %67 : vector<8x196xf32>
      %69 = arith.addf %61, %68 : vector<8x196xf32>
      %c5 = arith.constant 5 : index
      %70 = arith.index_cast %6 : i32 to index
      %c0_23 = arith.constant 0 : index
      %71 = vector.load %arg1[%c5, %70, %c0_23] : memref<9x8x196xf32, #tpu.memory_space<vmem>>, vector<1x8x196xf32>
      %72 = vector.shape_cast %71 : vector<1x8x196xf32> to vector<8x196xf32>
      %73 = arith.index_cast %arg7 : i32 to index
      %c5_24 = arith.constant 5 : index
      %74 = memref.load %arg2[%73, %c5_24] : memref<10x9xf32, #tpu.memory_space<smem>>
      %75 = vector.broadcast %74 : f32 to vector<8x196xf32>
      %76 = arith.mulf %72, %75 : vector<8x196xf32>
      %77 = arith.addf %69, %76 : vector<8x196xf32>
      %c6 = arith.constant 6 : index
      %78 = arith.index_cast %6 : i32 to index
      %c0_25 = arith.constant 0 : index
      %79 = vector.load %arg1[%c6, %78, %c0_25] : memref<9x8x196xf32, #tpu.memory_space<vmem>>, vector<1x8x196xf32>
      %80 = vector.shape_cast %79 : vector<1x8x196xf32> to vector<8x196xf32>
      %81 = arith.index_cast %arg7 : i32 to index
      %c6_26 = arith.constant 6 : index
      %82 = memref.load %arg2[%81, %c6_26] : memref<10x9xf32, #tpu.memory_space<smem>>
      %83 = vector.broadcast %82 : f32 to vector<8x196xf32>
      %84 = arith.mulf %80, %83 : vector<8x196xf32>
      %85 = arith.addf %77, %84 : vector<8x196xf32>
      %c7 = arith.constant 7 : index
      %86 = arith.index_cast %6 : i32 to index
      %c0_27 = arith.constant 0 : index
      %87 = vector.load %arg1[%c7, %86, %c0_27] : memref<9x8x196xf32, #tpu.memory_space<vmem>>, vector<1x8x196xf32>
      %88 = vector.shape_cast %87 : vector<1x8x196xf32> to vector<8x196xf32>
      %89 = arith.index_cast %arg7 : i32 to index
      %c7_28 = arith.constant 7 : index
      %90 = memref.load %arg2[%89, %c7_28] : memref<10x9xf32, #tpu.memory_space<smem>>
      %91 = vector.broadcast %90 : f32 to vector<8x196xf32>
      %92 = arith.mulf %88, %91 : vector<8x196xf32>
      %93 = arith.addf %85, %92 : vector<8x196xf32>
      %c8 = arith.constant 8 : index
      %94 = arith.index_cast %6 : i32 to index
      %c0_29 = arith.constant 0 : index
      %95 = vector.load %arg1[%c8, %94, %c0_29] : memref<9x8x196xf32, #tpu.memory_space<vmem>>, vector<1x8x196xf32>
      %96 = vector.shape_cast %95 : vector<1x8x196xf32> to vector<8x196xf32>
      %97 = arith.index_cast %arg7 : i32 to index
      %c8_30 = arith.constant 8 : index
      %98 = memref.load %arg2[%97, %c8_30] : memref<10x9xf32, #tpu.memory_space<smem>>
      %99 = vector.broadcast %98 : f32 to vector<8x196xf32>
      %100 = arith.mulf %96, %99 : vector<8x196xf32>
      %101 = arith.addf %93, %100 : vector<8x196xf32>
      %102 = arith.index_cast %arg7 : i32 to index
      %103 = memref.load %arg3[%102] : memref<10xf32, #tpu.memory_space<smem>>
      %104 = vector.broadcast %103 : f32 to vector<8x196xf32>
      %105 = arith.addf %101, %104 : vector<8x196xf32>
      %cst_31 = arith.constant 0.000000e+00 : f32
      %106 = vector.broadcast %cst_31 : f32 to vector<8x196xf32>
      %107 = arith.maximumf %105, %106 : vector<8x196xf32>
      %108 = arith.index_cast %arg7 : i32 to index
      %c0_32 = arith.constant 0 : index
      %c0_33 = arith.constant 0 : index
      %109 = vector.load %arg4[%108, %c0_32, %c0_33] : memref<10x196x128xf32, #tpu.memory_space<vmem>>, vector<1x196x128xf32>
      %110 = vector.shape_cast %109 : vector<1x196x128xf32> to vector<196x128xf32>
      %cst_34 = arith.constant dense<0.000000e+00> : vector<8x128xf32>
      %111 = tpu.matmul %107, %110, %cst_34 {dimension_numbers = #tpu.dot_dimension_numbers<[1], [0], [0], [1], [0, 0, 1, 1], [], []>} : vector<8x196xf32>, vector<196x128xf32>, vector<8x128xf32> -> vector<8x128xf32>
      %112 = arith.addf %arg8, %111 : vector<8x128xf32>
      scf.yield %112 : vector<8x128xf32>
    }
    %c10_i32_5 = arith.constant 10 : i32
    %cst_6 = arith.constant 0xFF800000 : f32
    %13 = vector.broadcast %cst_6 : f32 to vector<8x128xf32>
    %14 = arith.select %2, %12, %13 : vector<8x128xi1>, vector<8x128xf32>
    %cst_7 = arith.constant dense<0xFF800000> : vector<8xf32>
    %15 = vector.multi_reduction <maximumf>, %14, %cst_7 [1] : vector<8x128xf32> to vector<8xf32>
    %16 = vector.shape_cast %15 : vector<8xf32> to vector<8x1xf32>
    %17 = vector.broadcast %16 : vector<8x1xf32> to vector<8x128xf32>
    %18 = arith.subf %14, %17 : vector<8x128xf32>
    %19 = math.exp %18 : vector<8x128xf32>
    %cst_8 = arith.constant dense<0.000000e+00> : vector<8xf32>
    %20 = vector.multi_reduction <add>, %19, %cst_8 [1] : vector<8x128xf32> to vector<8xf32>
    %21 = vector.shape_cast %20 : vector<8xf32> to vector<8x1xf32>
    %22 = math.log %21 : vector<8x1xf32>
    %23 = vector.broadcast %16 : vector<8x1xf32> to vector<8x128xf32>
    %24 = arith.subf %12, %23 : vector<8x128xf32>
    %25 = vector.broadcast %22 : vector<8x1xf32> to vector<8x128xf32>
    %26 = arith.subf %24, %25 : vector<8x128xf32>
    %cst_9 = arith.constant 0.000000e+00 : f32
    %27 = vector.broadcast %cst_9 : f32 to vector<8x128xf32>
    %28 = arith.select %2, %26, %27 : vector<8x128xi1>, vector<8x128xf32>
    %29 = arith.index_cast %6 : i32 to index
    %c0_10 = arith.constant 0 : index
    %30 = vector.load %arg6[%29, %c0_10] : memref<8x128xf32, #tpu.memory_space<vmem>>, vector<8x128xf32>
    tpu.vector_store %arg6[%29, %c0_10], %28 {strides = array<i32>} : memref<8x128xf32, #tpu.memory_space<vmem>>, vector<8x128xf32>,
    %c1_i32_11 = arith.constant 1 : i32
    return
  }
  func.func @transform_0(%arg0: i32) -> (i32, i32, i32) {
    %c0_i32 = arith.constant 0 : i32
    %c0_i32_0 = arith.constant 0 : i32
    %c0_i32_1 = arith.constant 0 : i32
    return %c0_i32, %arg0, %c0_i32_0 : i32, i32, i32
  }
  func.func @transform_1(%arg0: i32) -> (i32, i32) {
    %c0_i32 = arith.constant 0 : i32
    %c0_i32_0 = arith.constant 0 : i32
    %c0_i32_1 = arith.constant 0 : i32
    return %c0_i32, %c0_i32_0 : i32, i32
  }
  func.func @transform_2(%arg0: i32) -> i32 {
    %c0_i32 = arith.constant 0 : i32
    %c0_i32_0 = arith.constant 0 : i32
    return %c0_i32 : i32
  }
  func.func @transform_3(%arg0: i32) -> (i32, i32, i32) {
    %c0_i32 = arith.constant 0 : i32
    %c0_i32_0 = arith.constant 0 : i32
    %c0_i32_1 = arith.constant 0 : i32
    %c0_i32_2 = arith.constant 0 : i32
    return %c0_i32, %c0_i32_0, %c0_i32_1 : i32, i32, i32
  }
  func.func @transform_4(%arg0: i32) -> (i32, i32) {
    %c0_i32 = arith.constant 0 : i32
    %c0_i32_0 = arith.constant 0 : i32
    %c0_i32_1 = arith.constant 0 : i32
    return %c0_i32, %c0_i32_0 : i32, i32
  }
  func.func @transform_5(%arg0: i32) -> (i32, i32) {
    %c0_i32 = arith.constant 0 : i32
    %c0_i32_0 = arith.constant 0 : i32
    return %arg0, %c0_i32 : i32, i32
  }
}

</mosaic_0001>

<llo_original>
// kernel: simple_cnn_forward.2
$region0: #{simple_cnn_forward.2}
  #allocation0 [shape = 'u32[]', space=smem, size = 0x4, offset = 0x4, fixed_abs, tag = 'smem constant byte address 0x4 - core index']
  #allocation1 [shape = 'u32[144,128]{1,0:T(1,128)}', space=vmem, size = 0x12000, scoped, tag = 'internal scratch']
  #allocation2 [shape = 'u32[2048]{0}', space=vmem, size = 0x2000, scoped, tag = 'scoped memory for simple_cnn_forward.2']
  #allocation3 [shape = 'u32[2048]{0}', space=vmem, size = 0x2000, scoped, tag = 'scoped memory for simple_cnn_forward.2']
  #allocation4 [shape = 'u32[2048]{0}', space=vmem, size = 0x2000, scoped, tag = 'scoped memory for simple_cnn_forward.2']
  #allocation5 [shape = 'u32[2048]{0}', space=vmem, size = 0x2000, scoped, tag = 'scoped memory for simple_cnn_forward.2']
  #allocation6 [shape = 'u32[2048]{0}', space=vmem, size = 0x2000, scoped, tag = 'scoped memory for simple_cnn_forward.2']
  %s0 = inlined_call_operand.vmem [shape: f32[10,9], index: 0, kind: input, shape index: {}]
  %s1 = inlined_call_operand.vmem [shape: f32[10], index: 1, kind: input, shape index: {}]
  %s2 = inlined_call_operand.vmem [shape: f32[10,196,128], index: 2, kind: input, shape index: {}]
  %s3 = inlined_call_operand.vmem [shape: f32[1,128], index: 3, kind: input, shape index: {}]
  %s4 = inlined_call_operand.vmem [shape: f32[9,2,196], index: 4, kind: input, shape index: {}]
  %s5 = inlined_call_operand.<no memory space> [shape: f32[], index: 5, kind: input, shape index: {}]
  %s6 = inlined_call_operand.vmem [shape: f32[8,128], index: 6, kind: output, shape index: {}]
  %s7 = sld [smem:[#allocation0]]
  $region45: #{simple_cnn_forward.2} parent=0
    _
  %s9 = ssub.s32 1, %s7
  %s10 = scalar_select 0, %s9, %s7
  %v11 = vstv %s5
  $region1: #{simple_cnn_forward.2} parent=0
    #allocation7 [shape = 'u8[8192]{0}', space=smem, size = 0x2000, scoped, tag = 'input window, operand 1, single buffered']
    #allocation8 [shape = 's32[1]{0}', space=sflag, size = 0x4, scoped, tag = 'scoped memory for simple_cnn_forward.2']
    #allocation9 [shape = 'u8[512]{0}', space=smem, size = 0x200, scoped, tag = 'input window, operand 2, single buffered']
    #allocation10 [shape = 's32[1]{0}', space=sflag, size = 0x4, scoped, tag = 'scoped memory for simple_cnn_forward.2']
    #allocation11 [shape = 'u8[73728]{0}', space=vmem, size = 0x12000, dematerialized = true, scoped, tag = 'FusionAdapter Buffer %fusion.1 = f32[9,8,196]{2,1,0:T(8,128)} fusion(%param_4.1, %param_5), kind=kLoop, calls=%fused_computation.1.clone, metadata={op_name="jit(simple_cnn_forward)/jit(_pad)/pad" stack_frame_id=13}']
    %12 = vsyncpa [#allocation8], 0
    %13 = vsyncpa [#allocation10], 0
    // Predicated region
    $region2: #{simple_cnn_forward.2} parent=1 // pred_check
      _
    $region3: #{simple_cnn_forward.2} parent=1 // pred_check_branch
      %15 = sbr.rel (0) target = $region5
    $region4: #{simple_cnn_forward.2} parent=1 // pred_region
      _
    $region5: #{simple_cnn_forward.2} parent=1 // pred_fallthru
      _
    // Predicated region
    $region6: #{simple_cnn_forward.2} parent=1 // pred_check
      _
    $region7: #{simple_cnn_forward.2} parent=1 // pred_check_branch
      %17 = sbr.rel (0) target = $region9
    $region8: #{simple_cnn_forward.2} parent=1 // pred_region
      %s19 = ssub.s32 256, 256
      %20 = vsyncadd [#allocation8], %s19
      %s21 = sshll.u32 %s0, 4
      %s22 = int_to_ptr.vmem [resolvable:$true] %s21
      %27 = dma.vmem_to_smem %s22, 256, [#allocation7], [#allocation8], 128, 128, 8
    $region9: #{simple_cnn_forward.2} parent=1 // pred_fallthru
      _
    // Predicated region
    $region10: #{simple_cnn_forward.2} parent=1 // pred_check
      _
    $region11: #{simple_cnn_forward.2} parent=1 // pred_check_branch
      %29 = sbr.rel (0) target = $region13
    $region12: #{simple_cnn_forward.2} parent=1 // pred_region
      %s31 = ssub.s32 16, 16
      %32 = vsyncadd [#allocation10], %s31
      %s34 = sshll.u32 %s1, 4
      %s35 = int_to_ptr.vmem [resolvable:$true] %s34
      %37 = dma.vmem_to_smem %s35, 16, [#allocation9], [#allocation10]
    $region13: #{simple_cnn_forward.2} parent=1 // pred_fallthru
      _
    // Predicated region
    $region14: #{simple_cnn_forward.2} parent=1 // pred_check
      _
    $region15: #{simple_cnn_forward.2} parent=1 // pred_check_branch
      %39 = sbr.rel (0) target = $region17
    $region16: #{simple_cnn_forward.2} parent=1 // pred_region
      _
    $region17: #{simple_cnn_forward.2} parent=1 // pred_fallthru
      _
    // Predicated region
    $region18: #{simple_cnn_forward.2} parent=1 // pred_check
      _
    $region19: #{simple_cnn_forward.2} parent=1 // pred_check_branch
      %41 = sbr.rel (0) target = $region21
    $region20: #{simple_cnn_forward.2} parent=1 // pred_region
      _
    $region21: #{simple_cnn_forward.2} parent=1 // pred_fallthru
      _
    // Predicated region
    $region22: #{simple_cnn_forward.2} parent=1 // pred_check
      _
    $region23: #{simple_cnn_forward.2} parent=1 // pred_check_branch
      %43 = sbr.rel (0) target = $region25
    $region24: #{simple_cnn_forward.2} parent=1 // pred_region
      %44 = dma.done [#allocation8], 256
    $region25: #{simple_cnn_forward.2} parent=1 // pred_fallthru
      _
    // Predicated region
    $region26: #{simple_cnn_forward.2} parent=1 // pred_check
      _
    $region27: #{simple_cnn_forward.2} parent=1 // pred_check_branch
      %46 = sbr.rel (0) target = $region29
    $region28: #{simple_cnn_forward.2} parent=1 // pred_region
      %47 = dma.done [#allocation10], 16
    $region29: #{simple_cnn_forward.2} parent=1 // pred_fallthru
      _
    %48 = sfence
    %v49 = vld [vmem:[%s4] sm:$0x3]
    %v50 = vlaneseq
    %v51 = vshrl.u32 %v50, 7
    %vm53 = vcmp.lt.s32.totalorder %v51, 2
    %v54 = vsel %vm53, %v49, %v11
    %v55 = vlaneseq
    %v56 = vand.u32 %v55, 127
    %vm58 = vcmp.lt.s32.totalorder %v56, 196
    %v59 = vsel %vm58, %v54, %v11
    %61 = vst [vmem:[#allocation11] sm:$0xff] %v59
    %s62 = scalar_lea.vmem %s4, 2
    %v63 = vld [vmem:[%s62] sm:$0x3]
    %v64 = vlaneseq
    %v65 = vshrl.u32 %v64, 7
    %vm67 = vcmp.lt.s32.totalorder %v65, 2
    %v68 = vsel %vm67, %v63, %v11
    %v69 = vlaneseq
    %v70 = vand.u32 %v69, 127
    %v71 = vadd.s32 %v70, 128
    %vm72 = vcmp.lt.s32.totalorder %v71, 196
    %v73 = vsel %vm72, %v68, %v11
    %s74 = scalar_lea.vmem [#allocation11], 8
    %76 = vst [vmem:[%s74] sm:$0xff] %v73
    %s77 = scalar_lea.vmem %s4, 4
    %v78 = vld [vmem:[%s77] sm:$0x3]
    %v79 = vlaneseq
    %v80 = vshrl.u32 %v79, 7
    %vm82 = vcmp.lt.s32.totalorder %v80, 2
    %v83 = vsel %vm82, %v78, %v11
    %v84 = vlaneseq
    %v85 = vand.u32 %v84, 127
    %vm87 = vcmp.lt.s32.totalorder %v85, 196
    %v88 = vsel %vm87, %v83, %v11
    %s89 = scalar_lea.vmem [#allocation11], 16
    %91 = vst [vmem:[%s89] sm:$0xff] %v88
    %s92 = scalar_lea.vmem %s4, 6
    %v93 = vld [vmem:[%s92] sm:$0x3]
    %v94 = vlaneseq
    %v95 = vshrl.u32 %v94, 7
    %vm97 = vcmp.lt.s32.totalorder %v95, 2
    %v98 = vsel %vm97, %v93, %v11
    %v99 = vlaneseq
    %v100 = vand.u32 %v99, 127
    %v101 = vadd.s32 %v100, 128
    %vm102 = vcmp.lt.s32.totalorder %v101, 196
    %v103 = vsel %vm102, %v98, %v11
    %s104 = scalar_lea.vmem [#allocation11], 24
    %106 = vst [vmem:[%s104] sm:$0xff] %v103
    %s107 = scalar_lea.vmem %s4, 8
    %v108 = vld [vmem:[%s107] sm:$0x3]
    %v109 = vlaneseq
    %v110 = vshrl.u32 %v109, 7
    %vm112 = vcmp.lt.s32.totalorder %v110, 2
    %v113 = vsel %vm112, %v108, %v11
    %v114 = vlaneseq
    %v115 = vand.u32 %v114, 127
    %vm117 = vcmp.lt.s32.totalorder %v115, 196
    %v118 = vsel %vm117, %v113, %v11
    %s119 = scalar_lea.vmem [#allocation11], 32
    %121 = vst [vmem:[%s119] sm:$0xff] %v118
    %s122 = scalar_lea.vmem %s4, 10
    %v123 = vld [vmem:[%s122] sm:$0x3]
    %v124 = vlaneseq
    %v125 = vshrl.u32 %v124, 7
    %vm127 = vcmp.lt.s32.totalorder %v125, 2
    %v128 = vsel %vm127, %v123, %v11
    %v129 = vlaneseq
    %v130 = vand.u32 %v129, 127
    %v131 = vadd.s32 %v130, 128
    %vm132 = vcmp.lt.s32.totalorder %v131, 196
    %v133 = vsel %vm132, %v128, %v11
    %s134 = scalar_lea.vmem [#allocation11], 40
    %136 = vst [vmem:[%s134] sm:$0xff] %v133
    %s137 = scalar_lea.vmem %s4, 12
    %v138 = vld [vmem:[%s137] sm:$0x3]
    %v139 = vlaneseq
    %v140 = vshrl.u32 %v139, 7
    %vm142 = vcmp.lt.s32.totalorder %v140, 2
    %v143 = vsel %vm142, %v138, %v11
    %v144 = vlaneseq
    %v145 = vand.u32 %v144, 127
    %vm147 = vcmp.lt.s32.totalorder %v145, 196
    %v148 = vsel %vm147, %v143, %v11
    %s149 = scalar_lea.vmem [#allocation11], 48
    %151 = vst [vmem:[%s149] sm:$0xff] %v148
    %s152 = scalar_lea.vmem %s4, 14
    %v153 = vld [vmem:[%s152] sm:$0x3]
    %v154 = vlaneseq
    %v155 = vshrl.u32 %v154, 7
    %vm157 = vcmp.lt.s32.totalorder %v155, 2
    %v158 = vsel %vm157, %v153, %v11
    %v159 = vlaneseq
    %v160 = vand.u32 %v159, 127
    %v161 = vadd.s32 %v160, 128
    %vm162 = vcmp.lt.s32.totalorder %v161, 196
    %v163 = vsel %vm162, %v158, %v11
    %s164 = scalar_lea.vmem [#allocation11], 56
    %166 = vst [vmem:[%s164] sm:$0xff] %v163
    %s167 = scalar_lea.vmem %s4, 16
    %v168 = vld [vmem:[%s167] sm:$0x3]
    %v169 = vlaneseq
    %v170 = vshrl.u32 %v169, 7
    %vm172 = vcmp.lt.s32.totalorder %v170, 2
    %v173 = vsel %vm172, %v168, %v11
    %v174 = vlaneseq
    %v175 = vand.u32 %v174, 127
    %vm177 = vcmp.lt.s32.totalorder %v175, 196
    %v178 = vsel %vm177, %v173, %v11
    %s179 = scalar_lea.vmem [#allocation11], 64
    %181 = vst [vmem:[%s179] sm:$0xff] %v178
    %s182 = scalar_lea.vmem %s4, 18
    %v183 = vld [vmem:[%s182] sm:$0x3]
    %v184 = vlaneseq
    %v185 = vshrl.u32 %v184, 7
    %vm187 = vcmp.lt.s32.totalorder %v185, 2
    %v188 = vsel %vm187, %v183, %v11
    %v189 = vlaneseq
    %v190 = vand.u32 %v189, 127
    %v191 = vadd.s32 %v190, 128
    %vm192 = vcmp.lt.s32.totalorder %v191, 196
    %v193 = vsel %vm192, %v188, %v11
    %s194 = scalar_lea.vmem [#allocation11], 72
    %196 = vst [vmem:[%s194] sm:$0xff] %v193
    %s197 = scalar_lea.vmem %s4, 20
    %v198 = vld [vmem:[%s197] sm:$0x3]
    %v199 = vlaneseq
    %v200 = vshrl.u32 %v199, 7
    %vm202 = vcmp.lt.s32.totalorder %v200, 2
    %v203 = vsel %vm202, %v198, %v11
    %v204 = vlaneseq
    %v205 = vand.u32 %v204, 127
    %vm207 = vcmp.lt.s32.totalorder %v205, 196
    %v208 = vsel %vm207, %v203, %v11
    %s209 = scalar_lea.vmem [#allocation11], 80
    %211 = vst [vmem:[%s209] sm:$0xff] %v208
    %s212 = scalar_lea.vmem %s4, 22
    %v213 = vld [vmem:[%s212] sm:$0x3]
    %v214 = vlaneseq
    %v215 = vshrl.u32 %v214, 7
    %vm217 = vcmp.lt.s32.totalorder %v215, 2
    %v218 = vsel %vm217, %v213, %v11
    %v219 = vlaneseq
    %v220 = vand.u32 %v219, 127
    %v221 = vadd.s32 %v220, 128
    %vm222 = vcmp.lt.s32.totalorder %v221, 196
    %v223 = vsel %vm222, %v218, %v11
    %s224 = scalar_lea.vmem [#allocation11], 88
    %226 = vst [vmem:[%s224] sm:$0xff] %v223
    %s227 = scalar_lea.vmem %s4, 24
    %v228 = vld [vmem:[%s227] sm:$0x3]
    %v229 = vlaneseq
    %v230 = vshrl.u32 %v229, 7
    %vm232 = vcmp.lt.s32.totalorder %v230, 2
    %v233 = vsel %vm232, %v228, %v11
    %v234 = vlaneseq
    %v235 = vand.u32 %v234, 127
    %vm237 = vcmp.lt.s32.totalorder %v235, 196
    %v238 = vsel %vm237, %v233, %v11
    %s239 = scalar_lea.vmem [#allocation11], 96
    %241 = vst [vmem:[%s239] sm:$0xff] %v238
    %s242 = scalar_lea.vmem %s4, 26
    %v243 = vld [vmem:[%s242] sm:$0x3]
    %v244 = vlaneseq
    %v245 = vshrl.u32 %v244, 7
    %vm247 = vcmp.lt.s32.totalorder %v245, 2
    %v248 = vsel %vm247, %v243, %v11
    %v249 = vlaneseq
    %v250 = vand.u32 %v249, 127
    %v251 = vadd.s32 %v250, 128
    %vm252 = vcmp.lt.s32.totalorder %v251, 196
    %v253 = vsel %vm252, %v248, %v11
    %s254 = scalar_lea.vmem [#allocation11], 104
    %256 = vst [vmem:[%s254] sm:$0xff] %v253
    %s257 = scalar_lea.vmem %s4, 28
    %v258 = vld [vmem:[%s257] sm:$0x3]
    %v259 = vlaneseq
    %v260 = vshrl.u32 %v259, 7
    %vm262 = vcmp.lt.s32.totalorder %v260, 2
    %v263 = vsel %vm262, %v258, %v11
    %v264 = vlaneseq
    %v265 = vand.u32 %v264, 127
    %vm267 = vcmp.lt.s32.totalorder %v265, 196
    %v268 = vsel %vm267, %v263, %v11
    %s269 = scalar_lea.vmem [#allocation11], 112
    %271 = vst [vmem:[%s269] sm:$0xff] %v268
    %s272 = scalar_lea.vmem %s4, 30
    %v273 = vld [vmem:[%s272] sm:$0x3]
    %v274 = vlaneseq
    %v275 = vshrl.u32 %v274, 7
    %vm277 = vcmp.lt.s32.totalorder %v275, 2
    %v278 = vsel %vm277, %v273, %v11
    %v279 = vlaneseq
    %v280 = vand.u32 %v279, 127
    %v281 = vadd.s32 %v280, 128
    %vm282 = vcmp.lt.s32.totalorder %v281, 196
    %v283 = vsel %vm282, %v278, %v11
    %s284 = scalar_lea.vmem [#allocation11], 120
    %286 = vst [vmem:[%s284] sm:$0xff] %v283
    %s287 = scalar_lea.vmem %s4, 32
    %v288 = vld [vmem:[%s287] sm:$0x3]
    %v289 = vlaneseq
    %v290 = vshrl.u32 %v289, 7
    %vm292 = vcmp.lt.s32.totalorder %v290, 2
    %v293 = vsel %vm292, %v288, %v11
    %v294 = vlaneseq
    %v295 = vand.u32 %v294, 127
    %vm297 = vcmp.lt.s32.totalorder %v295, 196
    %v298 = vsel %vm297, %v293, %v11
    %s299 = scalar_lea.vmem [#allocation11], 128
    %301 = vst [vmem:[%s299] sm:$0xff] %v298
    %s302 = scalar_lea.vmem %s4, 34
    %v303 = vld [vmem:[%s302] sm:$0x3]
    %v304 = vlaneseq
    %v305 = vshrl.u32 %v304, 7
    %vm307 = vcmp.lt.s32.totalorder %v305, 2
    %v308 = vsel %vm307, %v303, %v11
    %v309 = vlaneseq
    %v310 = vand.u32 %v309, 127
    %v311 = vadd.s32 %v310, 128
    %vm312 = vcmp.lt.s32.totalorder %v311, 196
    %v313 = vsel %vm312, %v308, %v11
    %s314 = scalar_lea.vmem [#allocation11], 136
    %316 = vst [vmem:[%s314] sm:$0xff] %v313
    %v317 = vlaneseq
    %v318 = vand.u32 %v317, 127
    %vm319 = vcmp.lt.s32.totalorder %v318, 10
    %v320 = vld [vmem:[%s3] sm:$0x1]
    %v322 = vlaneseq
    %v323 = vshrl.u32 %v322, 7
    %v324 = vsub.s32 0, %v323
    %v325 = vrot.slane %v320, %v324
    %v327 = vadd.f32 %v325, 0.0
    loop: start=0, step=1, limit=10
    $region30: #{simple_cnn_forward.2} parent=1 // loop_pre_header
      _
    $region31: #{simple_cnn_forward.2} parent=1 // loop_header
      %s329 = sphi 0, %s333
      %p330 = scmp.ge.s32.totalorder %s329, 10
      %v334 = vphi %v327, %v552
    $region32: #{simple_cnn_forward.2} parent=1 // loop_header_branch
      %332 = sbr.rel (%p330) target = $region36
    $region33: #{simple_cnn_forward.2} parent=1 // loop_body
      %s335 = smul.u32 0, 2
      %s336 = smul.addr %s335, 8
      %s337 = scalar_lea.vmem [#allocation11], %s336
      %v338 = vld [vmem:[%s337] sm:$0xff]
      %v339 = vld [vmem:[%s337 + $0x8] sm:$0xff]
      %s340 = smul.u32 %s329, 128
      %s341 = sld [smem:[#allocation7 + %s340]]
      %v342 = vstv %s341
      %v343 = vmul.f32 %v338, %v342
      %v344 = vmul.f32 %v339, %v342
      %s345 = sadd.s32 %s335, 2
      %s346 = smul.addr %s345, 8
      %s347 = scalar_lea.vmem [#allocation11], %s346
      %v348 = vld [vmem:[%s347] sm:$0xff]
      %v349 = vld [vmem:[%s347 + $0x8] sm:$0xff]
      %s350 = sadd.s32 %s340, 1
      %s351 = sld [smem:[#allocation7 + %s350]]
      %v352 = vstv %s351
      %v353 = vmul.f32 %v348, %v352
      %v354 = vmul.f32 %v349, %v352
      %v355 = vadd.f32 %v343, %v353
      %v356 = vadd.f32 %v344, %v354
      %s357 = sadd.s32 %s335, 4
      %s358 = smul.addr %s357, 8
      %s359 = scalar_lea.vmem [#allocation11], %s358
      %v360 = vld [vmem:[%s359] sm:$0xff]
      %v361 = vld [vmem:[%s359 + $0x8] sm:$0xff]
      %s362 = sadd.s32 %s340, 2
      %s363 = sld [smem:[#allocation7 + %s362]]
      %v364 = vstv %s363
      %v365 = vmul.f32 %v360, %v364
      %v366 = vmul.f32 %v361, %v364
      %v367 = vadd.f32 %v355, %v365
      %v368 = vadd.f32 %v356, %v366
      %s369 = sadd.s32 %s335, 6
      %s370 = smul.addr %s369, 8
      %s371 = scalar_lea.vmem [#allocation11], %s370
      %v372 = vld [vmem:[%s371] sm:$0xff]
      %v373 = vld [vmem:[%s371 + $0x8] sm:$0xff]
      %s374 = sadd.s32 %s340, 3
      %s375 = sld [smem:[#allocation7 + %s374]]
      %v376 = vstv %s375
      %v377 = vmul.f32 %v372, %v376
      %v378 = vmul.f32 %v373, %v376
      %v379 = vadd.f32 %v367, %v377
      %v380 = vadd.f32 %v368, %v378
      %s381 = sadd.s32 %s335, 8
      %s382 = smul.addr %s381, 8
      %s383 = scalar_lea.vmem [#allocation11], %s382
      %v384 = vld [vmem:[%s383] sm:$0xff]
      %v385 = vld [vmem:[%s383 + $0x8] sm:$0xff]
      %s386 = sadd.s32 %s340, 4
      %s387 = sld [smem:[#allocation7 + %s386]]
      %v388 = vstv %s387
      %v389 = vmul.f32 %v384, %v388
      %v390 = vmul.f32 %v385, %v388
      %v391 = vadd.f32 %v379, %v389
      %v392 = vadd.f32 %v380, %v390
      %s393 = sadd.s32 %s335, 10
      %s394 = smul.addr %s393, 8
      %s395 = scalar_lea.vmem [#allocation11], %s394
      %v396 = vld [vmem:[%s395] sm:$0xff]
      %v397 = vld [vmem:[%s395 + $0x8] sm:$0xff]
      %s398 = sadd.s32 %s340, 5
      %s399 = sld [smem:[#allocation7 + %s398]]
      %v400 = vstv %s399
      %v401 = vmul.f32 %v396, %v400
      %v402 = vmul.f32 %v397, %v400
      %v403 = vadd.f32 %v391, %v401
      %v404 = vadd.f32 %v392, %v402
      %s405 = sadd.s32 %s335, 12
      %s406 = smul.addr %s405, 8
      %s407 = scalar_lea.vmem [#allocation11], %s406
      %v408 = vld [vmem:[%s407] sm:$0xff]
      %v409 = vld [vmem:[%s407 + $0x8] sm:$0xff]
      %s410 = sadd.s32 %s340, 6
      %s411 = sld [smem:[#allocation7 + %s410]]
      %v412 = vstv %s411
      %v413 = vmul.f32 %v408, %v412
      %v414 = vmul.f32 %v409, %v412
      %v415 = vadd.f32 %v403, %v413
      %v416 = vadd.f32 %v404, %v414
      %s417 = sadd.s32 %s335, 14
      %s418 = smul.addr %s417, 8
      %s419 = scalar_lea.vmem [#allocation11], %s418
      %v420 = vld [vmem:[%s419] sm:$0xff]
      %v421 = vld [vmem:[%s419 + $0x8] sm:$0xff]
      %s422 = sadd.s32 %s340, 7
      %s423 = sld [smem:[#allocation7 + %s422]]
      %v424 = vstv %s423
      %v425 = vmul.f32 %v420, %v424
      %v426 = vmul.f32 %v421, %v424
      %v427 = vadd.f32 %v415, %v425
      %v428 = vadd.f32 %v416, %v426
      %s429 = sadd.s32 %s335, 16
      %s430 = smul.addr %s429, 8
      %s431 = scalar_lea.vmem [#allocation11], %s430
      %v432 = vld [vmem:[%s431] sm:$0xff]
      %v433 = vld [vmem:[%s431 + $0x8] sm:$0xff]
      %s434 = sadd.s32 %s340, 8
      %s435 = sld [smem:[#allocation7 + %s434]]
      %v436 = vstv %s435
      %v437 = vmul.f32 %v432, %v436
      %v438 = vmul.f32 %v433, %v436
      %v439 = vadd.f32 %v427, %v437
      %v440 = vadd.f32 %v428, %v438
      %s441 = sld [smem:[#allocation9 + %s329]]
      %v442 = vstv %s441
      %v443 = vadd.f32 %v439, %v442
      %v444 = vadd.f32 %v440, %v442
      %v445 = vmax.f32 %v443, 0.0
      %v446 = vmax.f32 %v444, 0.0
      %s447 = smul.u32 %s329, 200
      %s448 = scalar_lea.vmem %s2, %s447
      %v449 = vld [vmem:[%s448] sm:$0xff]
      %v450 = vld [vmem:[%s448 + $0x8] sm:$0xff]
      %v451 = vld [vmem:[%s448 + $0x10] sm:$0xff]
      %v452 = vld [vmem:[%s448 + $0x18] sm:$0xff]
      %v453 = vld [vmem:[%s448 + $0x20] sm:$0xff]
      %v454 = vld [vmem:[%s448 + $0x28] sm:$0xff]
      %v455 = vld [vmem:[%s448 + $0x30] sm:$0xff]
      %v456 = vld [vmem:[%s448 + $0x38] sm:$0xff]
      %v457 = vld [vmem:[%s448 + $0x40] sm:$0xff]
      %v458 = vld [vmem:[%s448 + $0x48] sm:$0xff]
      %v459 = vld [vmem:[%s448 + $0x50] sm:$0xff]
      %v460 = vld [vmem:[%s448 + $0x58] sm:$0xff]
      %v461 = vld [vmem:[%s448 + $0x60] sm:$0xff]
      %v462 = vld [vmem:[%s448 + $0x68] sm:$0xff]
      %v463 = vld [vmem:[%s448 + $0x70] sm:$0xff]
      %v464 = vld [vmem:[%s448 + $0x78] sm:$0xff]
      %v465 = vld [vmem:[%s448 + $0x80] sm:$0xff]
      %v466 = vld [vmem:[%s448 + $0x88] sm:$0xff]
      %v467 = vld [vmem:[%s448 + $0x90] sm:$0xff]
      %v468 = vld [vmem:[%s448 + $0x98] sm:$0xff]
      %v469 = vld [vmem:[%s448 + $0xa0] sm:$0xff]
      %v470 = vld [vmem:[%s448 + $0xa8] sm:$0xff]
      %v471 = vld [vmem:[%s448 + $0xb0] sm:$0xff]
      %v472 = vld [vmem:[%s448 + $0xb8] sm:$0xff]
      %v473 = vld [vmem:[%s448 + $0xc0] sm:$0xf]
      %vm474 = vcmask 556032
      %v476 = vsel %vm474, %v446, 0
      %vm478 = vcmask 1043456
      %v480 = vsel %vm478, %v473, 0
      %482 = vmatprep.subr.mxu0 0.0
      %483 = vmatpush1.msra.mxu0 %v449
      %484 = vmatprep.subr.mxu0 0.0
      %485 = vmatpush1.msra.mxu0 %v450
      %486 = vmatprep.subr.mxu0 0.0
      %487 = vmatpush1.msra.mxu0 %v451
      %488 = vmatprep.subr.mxu0 0.0
      %489 = vmatpush1.msra.mxu0 %v452
      %490 = vmatprep.subr.mxu0 0.0
      %491 = vmatpush1.msra.mxu0 %v453
      %492 = vmatprep.subr.mxu0 0.0
      %493 = vmatpush1.msra.mxu0 %v454
      %494 = vmatprep.subr.mxu0 0.0
      %495 = vmatpush1.msra.mxu0 %v455
      %496 = vmatprep.subr.mxu0 0.0
      %497 = vmatpush1.msra.mxu0 %v456
      %498 = vmatprep.subr.mxu0 0.0
      %499 = vmatpush1.msra.mxu0 %v457
      %500 = vmatprep.subr.mxu0 0.0
      %501 = vmatpush1.msra.mxu0 %v458
      %502 = vmatprep.subr.mxu0 0.0
      %503 = vmatpush1.msra.mxu0 %v459
      %504 = vmatprep.subr.mxu0 0.0
      %505 = vmatpush1.msra.mxu0 %v460
      %506 = vmatprep.subr.mxu0 0.0
      %507 = vmatpush1.msra.mxu0 %v461
      %508 = vmatprep.subr.mxu0 0.0
      %509 = vmatpush1.msra.mxu0 %v462
      %510 = vmatprep.subr.mxu0 0.0
      %511 = vmatpush1.msra.mxu0 %v463
      %512 = vmatprep.subr.mxu0 0.0
      %513 = vmatpush1.msra.mxu0 %v464
      %514 = vmatprep.subr.mxu0 0.0
      %515 = vmatpush1.msra.mxu0 %v465
      %516 = vmatprep.subr.mxu0 0.0
      %517 = vmatpush1.msra.mxu0 %v466
      %518 = vmatprep.subr.mxu0 0.0
      %519 = vmatpush1.msra.mxu0 %v467
      %520 = vmatprep.subr.mxu0 0.0
      %521 = vmatpush1.msra.mxu0 %v468
      %522 = vmatprep.subr.mxu0 0.0
      %523 = vmatpush1.msra.mxu0 %v469
      %524 = vmatprep.subr.mxu0 0.0
      %525 = vmatpush1.msra.mxu0 %v470
      %526 = vmatprep.subr.mxu0 0.0
      %527 = vmatpush1.msra.mxu0 %v471
      %528 = vmatprep.subr.mxu0 0.0
      %529 = vmatpush1.msra.mxu0 %v472
      %530 = vmatprep.subr.mxu0 0.0
      %531 = vmatpush1.msra.mxu0 %v480
      %532 = vmatprep.subr.mxu0 0.0
      %533 = vmatpush1.msra.mxu0 0.0
      %534 = vmatprep.subr.mxu0 0.0
      %535 = vmatpush1.msra.mxu0 0.0
      %536 = vmatprep.subr.mxu0 0.0
      %537 = vmatpush1.msra.mxu0 0.0
      %538 = vmatprep.subr.mxu0 0.0
      %539 = vmatpush1.msra.mxu0 0.0
      %540 = vmatprep.subr.mxu0 0.0
      %541 = vmatpush1.msra.mxu0 0.0
      %542 = vmatprep.subr.mxu0 0.0
      %543 = vmatpush1.msra.mxu0 0.0
      %544 = vmatprep.subr.mxu0 0.0
      %545 = vmatpush1.msra.mxu0 0.0
      %546 = vmatprep.mubr.f32.mxu0 %v476
      %547 = vmatmul.mubr.f32.gmra.mrb[0].mxu0 %v445
      %v548 = vpop.f32.mrb[0].mxu0
      %v549 = vadd.f32 0.0, %v548
      %v550 = vpop.f32.mrb[0].mxu0
      %551 = vdwg.mxu0
      %v552 = vadd.f32 %v334, %v549
    $region34: #{simple_cnn_forward.2} parent=1 // loop_footer
      %s333 = sadd.s32 1, %s329
    $region35: #{simple_cnn_forward.2} parent=1 // loop_footer_branch
      %328 = sbr.rel target = $region31
    $region36: #{simple_cnn_forward.2} parent=1 // loop_exit
      _
    %v553 = vsel %vm319, %v334, -inf
    %554 = vmax.xlane.f32.xlu0 %v553
    %v555 = vpop.xlane.xlu0 %554
    %v556 = vsub.f32 %v553, %v555
    %v557 = vmul.f32 %v556, 1.442695
    %v558 = vpow.pop %v557
    %559 = vadd.xlane.f32.xlu0 %v558
    %v560 = vpop.xlane.xlu0 %559
    %v561 = vlog2.pop %v560
    %v562 = vmul.f32 %v561, 0.6931472
    %v563 = vsub.f32 %v334, %v555
    %v564 = vsub.f32 %v563, %v562
    %v565 = vsel %vm319, %v564, 0.0
    %566 = vst [vmem:[%s6] sm:$0xff] %v565
    // Predicated region
    $region37: #{simple_cnn_forward.2} parent=1 // pred_check
      _
    $region38: #{simple_cnn_forward.2} parent=1 // pred_check_branch
      %568 = sbr.rel (0) target = $region40
    $region39: #{simple_cnn_forward.2} parent=1 // pred_region
      _
    $region40: #{simple_cnn_forward.2} parent=1 // pred_fallthru
      _
    // Predicated region
    $region41: #{simple_cnn_forward.2} parent=1 // pred_check
      _
    $region42: #{simple_cnn_forward.2} parent=1 // pred_check_branch
      %570 = sbr.rel (0) target = $region44
    $region43: #{simple_cnn_forward.2} parent=1 // pred_region
      _
    $region44: #{simple_cnn_forward.2} parent=1 // pred_fallthru
      _
    %571 = vsyncpa [#allocation8], 1
    %572 = vsyncpa [#allocation10], 1

</llo_original>
